<compile_context>
chip_gen: v5e
topology: v5e:2x2
jax: 0.10.0
libtpu: 0.0.40
codegen_flags: <defaults>
</compile_context>

<pallas_src>
import functools

import jax
import jax.numpy as jnp
from jax.experimental import pallas as pl
from jax.experimental.pallas import tpu as pltpu

LANE = 128
MAX_TILE_ROWS = 8192   # 8192 x 128 x 4 B = 4 MiB per input tile (f32)


def _mse_body_kernel(x_ref, y_ref, o_ref, *, tile_rows, rows, need_edge_mask):
    """Accumulates per-(sublane, lane) partial sums of (x - y)^2 into o_ref."""
    j = pl.program_id(0)

    @pl.when(j == 0)
    def _():
        o_ref[...] = jnp.zeros_like(o_ref)

    d = x_ref[...].astype(jnp.float32) - y_ref[...].astype(jnp.float32)
    sq = d * d

    def accumulate(vals):
        # (tile_rows, 128) -> (tile_rows//8, 8, 128) is a free re-view; the
        # leading-axis sum lowers to vreg-vreg VALU adds (no XLU).
        o_ref[...] += jnp.sum(vals.reshape(tile_rows // 8, 8, LANE), axis=0)

    if need_edge_mask:
        is_edge = j == pl.num_programs(0) - 1

        @pl.when(jnp.logical_not(is_edge))
        def _():
            accumulate(sq)

        @pl.when(is_edge)
        def _():
            # Only the last tile over-covers `rows`; mask the padded rows.
            row_ids = (jax.lax.broadcasted_iota(jnp.int32, sq.shape, 0)
                       + j * tile_rows)
            accumulate(jnp.where(row_ids < rows, sq, 0.0))
    else:
        accumulate(sq)


def mse_loss(inputs, targets):
    """Mean squared error, equivalent to torch.nn.MSELoss() (reduction='mean')."""
    assert inputs.shape == targets.shape, "MSELoss expects matching shapes"
    n = inputs.size
    if n == 0:
        return jnp.float32(float("nan"))   # torch.nn.MSELoss on empty input -> nan

    x = inputs.reshape(-1)
    y = targets.reshape(-1)

    rows = n // LANE        # full lane-rows handled by the Pallas kernel
    rem = n % LANE          # <128-element tail handled by a tiny JAX term

    total = jnp.float32(0.0)

    if rows > 0:
        # Lane-dense [rows, 128] slab over the divisible prefix. When
        # rem == 0 (the common case) the slice is the full array and the
        # reshape is free (no HBM copy).
        x2d = x[:rows * LANE].reshape(rows, LANE)
        y2d = y[:rows * LANE].reshape(rows, LANE)

        # tile_rows is always a multiple of 8 so the (8, 128)-grouped
        # accumulation reshape is valid; a block may overhang the array only
        # on the last tile, which is masked in-kernel.
        tile_rows = min(MAX_TILE_ROWS, ((rows + 7) // 8) * 8)
        num_tiles = (rows + tile_rows - 1) // tile_rows
        need_edge_mask = (num_tiles * tile_rows) != rows

        kernel = functools.partial(
            _mse_body_kernel,
            tile_rows=tile_rows, rows=rows, need_edge_mask=need_edge_mask)

        partials = pl.pallas_call(
            kernel,
            out_shape=jax.ShapeDtypeStruct((8, LANE), jnp.float32),
            grid_spec=pltpu.PrefetchScalarGridSpec(
                num_scalar_prefetch=0,
                grid=(num_tiles,),
                in_specs=[
                    pl.BlockSpec((tile_rows, LANE), lambda j: (j, 0)),
                    pl.BlockSpec((tile_rows, LANE), lambda j: (j, 0)),
                ],
                # Constant block index across the (reduction) grid axis:
                # the (8, 128) output stays VMEM-resident and acts as the
                # accumulator, written back to HBM once at the end.
                out_specs=pl.BlockSpec((8, LANE), lambda j: (0, 0)),
            ),
            compiler_params=pltpu.CompilerParams(
                dimension_semantics=("arbitrary",),
                # 2 inputs x 2 pipeline buffers x 4 MiB ~= 16 MiB; raise the
                # scoped limit so v5e's 16 MiB default does not reject it
                # (matches the 32 MiB default on v6e/v7x).
                vmem_limit_bytes=32 << 20,
            ),
        )(x2d, y2d)

        total = total + jnp.sum(partials)

    if rem:
        # Tail of < 128 elements: negligible plain-JAX work, avoids padding /
        # masking the main body.
        xt = x[rows * LANE:].astype(jnp.float32)
        yt = y[rows * LANE:].astype(jnp.float32)
        dt = xt - yt
        total = total + jnp.sum(dt * dt)

    return total / jnp.float32(n)


if __name__ == "__main__":
    key = jax.random.PRNGKey(0)
    k1, k2 = jax.random.split(key)
    # Shapes consistent with a typical regression output, e.g. NCHW feature maps.
    shape = (2, 4, 16, 16)
    inputs = jax.random.normal(k1, shape, dtype=jnp.float32)
    targets = jax.random.normal(k2, shape, dtype=jnp.float32)

    loss = mse_loss(inputs, targets)
    jax.block_until_ready(loss)

    # Cross-check against plain-JAX reference.
    ref = jnp.mean((inputs - targets) ** 2)
    assert jnp.allclose(loss, ref, rtol=1e-5, atol=1e-6), (loss, ref)

    print("KERNEL_OK")
</pallas_src>

<mosaic_0001>
module attributes {stable_mosaic.version = 11 : i64} {
  func.func @_mse_body_kernel(%arg0: i32, %arg1: memref<16x128xf32, #tpu.memory_space<vmem>>, %arg2: memref<16x128xf32, #tpu.memory_space<vmem>>, %arg3: memref<8x128xf32, #tpu.memory_space<vmem>>) attributes {dimension_semantics = [#tpu.dimension_semantics<arbitrary>], iteration_bounds = array<i64: 1>, scalar_prefetch = 0 : i64, scratch_operands = 0 : i64, tpu.core_type = #tpu.core_type<tc>, window_params = [{transform_indices = @transform_0, window_bounds = array<i64: 16, 128>}, {transform_indices = @transform_1, window_bounds = array<i64: 16, 128>}, {pipeline_mode = #tpu.pipeline_mode<synchronous>, transform_indices = @transform_2, window_bounds = array<i64: 8, 128>}]} {
    %c0_i32 = arith.constant 0 : i32
    %0 = arith.cmpi eq, %arg0, %c0_i32 : i32
    %1 = arith.extui %0 : i1 to i32
    %c0_i32_0 = arith.constant 0 : i32
    %2 = arith.cmpi ne, %1, %c0_i32_0 : i32
    scf.if %2 {
      %cst_8 = arith.constant 0.000000e+00 : f32
      %12 = vector.broadcast %cst_8 : f32 to vector<8x128xf32>
      %c0_9 = arith.constant 0 : index
      %c0_10 = arith.constant 0 : index
      %13 = vector.load %arg3[%c0_9, %c0_10] : memref<8x128xf32, #tpu.memory_space<vmem>>, vector<8x128xf32>
      tpu.vector_store %arg3[%c0_9, %c0_10], %12 {strides = array<i32>} : memref<8x128xf32, #tpu.memory_space<vmem>>, vector<8x128xf32>,
    } else {
    }
    %c0 = arith.constant 0 : index
    %c0_1 = arith.constant 0 : index
    %3 = vector.load %arg1[%c0, %c0_1] : memref<16x128xf32, #tpu.memory_space<vmem>>, vector<16x128xf32>
    %c0_2 = arith.constant 0 : index
    %c0_3 = arith.constant 0 : index
    %4 = vector.load %arg2[%c0_2, %c0_3] : memref<16x128xf32, #tpu.memory_space<vmem>>, vector<16x128xf32>
    %5 = arith.subf %3, %4 : vector<16x128xf32>
    %6 = arith.mulf %5, %5 : vector<16x128xf32>
    %c0_4 = arith.constant 0 : index
    %c0_5 = arith.constant 0 : index
    %7 = vector.load %arg3[%c0_4, %c0_5] : memref<8x128xf32, #tpu.memory_space<vmem>>, vector<8x128xf32>
    %8 = vector.shape_cast %6 : vector<16x128xf32> to vector<2x8x128xf32>
    %cst = arith.constant dense<0.000000e+00> : vector<8x128xf32>
    %9 = vector.multi_reduction <add>, %8, %cst [0] : vector<2x8x128xf32> to vector<8x128xf32>
    %10 = arith.addf %7, %9 : vector<8x128xf32>
    %c0_6 = arith.constant 0 : index
    %c0_7 = arith.constant 0 : index
    %11 = vector.load %arg3[%c0_6, %c0_7] : memref<8x128xf32, #tpu.memory_space<vmem>>, vector<8x128xf32>
    tpu.vector_store %arg3[%c0_6, %c0_7], %10 {strides = array<i32>} : memref<8x128xf32, #tpu.memory_space<vmem>>, vector<8x128xf32>,
    return
  }
  func.func @transform_0(%arg0: i32) -> (i32, i32) {
    %c0_i32 = arith.constant 0 : i32
    %c0_i32_0 = arith.constant 0 : i32
    return %arg0, %c0_i32 : i32, i32
  }
  func.func @transform_1(%arg0: i32) -> (i32, i32) {
    %c0_i32 = arith.constant 0 : i32
    %c0_i32_0 = arith.constant 0 : i32
    return %arg0, %c0_i32 : i32, i32
  }
  func.func @transform_2(%arg0: i32) -> (i32, i32) {
    %c0_i32 = arith.constant 0 : i32
    %c0_i32_0 = arith.constant 0 : i32
    %c0_i32_1 = arith.constant 0 : i32
    return %c0_i32, %c0_i32_0 : i32, i32
  }
}

</mosaic_0001>

<llo_original>
// kernel: tpu_custom_call.1
$region0: #{tpu_custom_call.1}
  #allocation0 [shape = 'u32[]', space=smem, size = 0x4, offset = 0x4, fixed_abs, tag = 'smem constant byte address 0x4 - core index']
  #allocation1 [shape = 'u32[72,128]{1,0:T(1,128)}', space=vmem, size = 0x9000, scoped, tag = 'internal scratch']
  %s0 = inlined_call_operand.hbm [shape: f32[16,128], index: 0, kind: input, shape index: {}]
  %s1 = inlined_call_operand.hbm [shape: f32[16,128], index: 1, kind: input, shape index: {}]
  %s2 = inlined_call_operand.hbm [shape: f32[8,128], index: 2, kind: output, shape index: {}]
  %s3 = sld [smem:[#allocation0]]
  $region30: #{tpu_custom_call.1} parent=0
    _
  %s5 = ssub.s32 1, %s3
  %s6 = scalar_select 0, %s5, %s3
  $region1: #{tpu_custom_call.1} parent=0
    #allocation2 [shape = 'u8[8192]{0}', space=vmem, size = 0x2000, scoped, tag = 'input window, operand 0, single buffered']
    #allocation3 [shape = 's32[1]{0}', space=sflag, size = 0x4, scoped, tag = 'scoped memory for tpu_custom_call.1']
    #allocation4 [shape = 's32[1]{0}', space=sflag, size = 0x4, scoped, tag = 'scoped memory for tpu_custom_call.1']
    #allocation5 [shape = 'u8[8192]{0}', space=vmem, size = 0x2000, scoped, tag = 'input window, operand 1, single buffered']
    #allocation6 [shape = 's32[1]{0}', space=sflag, size = 0x4, scoped, tag = 'scoped memory for tpu_custom_call.1']
    #allocation7 [shape = 'u8[4096]{0}', space=vmem, size = 0x1000, scoped, tag = 'output window, operand 0, single buffered']
    %7 = vsyncpa [#allocation3], 0
    %8 = vsyncpa [#allocation6], 0
    %9 = vsyncpa [#allocation4], 0
    // Predicated region
    $region2: #{tpu_custom_call.1} parent=1 // pred_check
      _
    $region3: #{tpu_custom_call.1} parent=1 // pred_check_branch
      %11 = sbr.rel (0) target = $region5
    $region4: #{tpu_custom_call.1} parent=1 // pred_region
      %13 = vsyncadd [#allocation3], 0
      %s14 = sshll.u32 %s0, 4
      %s15 = int_to_ptr.hbm [resolvable:$true] %s14
      %s16 = sshll.u32 [#allocation2], 4
      %s17 = int_to_ptr.vmem [resolvable:$true] %s16
      %22 = dma.hbm_to_vmem [thread:$0]  %s15, 256, %s17, [#allocation3], 128, 128, 8
    $region5: #{tpu_custom_call.1} parent=1 // pred_fallthru
      _
    // Predicated region
    $region6: #{tpu_custom_call.1} parent=1 // pred_check
      _
    $region7: #{tpu_custom_call.1} parent=1 // pred_check_branch
      %24 = sbr.rel (0) target = $region9
    $region8: #{tpu_custom_call.1} parent=1 // pred_region
      %26 = vsyncadd [#allocation6], 0
      %s27 = sshll.u32 %s1, 4
      %s28 = int_to_ptr.hbm [resolvable:$true] %s27
      %s29 = sshll.u32 [#allocation5], 4
      %s30 = int_to_ptr.vmem [resolvable:$true] %s29
      %35 = dma.hbm_to_vmem [thread:$0]  %s28, 256, %s30, [#allocation6], 128, 128, 8
    $region9: #{tpu_custom_call.1} parent=1 // pred_fallthru
      _
    // Predicated region
    $region10: #{tpu_custom_call.1} parent=1 // pred_check
      _
    $region11: #{tpu_custom_call.1} parent=1 // pred_check_branch
      %37 = sbr.rel (0) target = $region13
    $region12: #{tpu_custom_call.1} parent=1 // pred_region
      %39 = dma.done [#allocation3], 256
    $region13: #{tpu_custom_call.1} parent=1 // pred_fallthru
      _
    // Predicated region
    $region14: #{tpu_custom_call.1} parent=1 // pred_check
      _
    $region15: #{tpu_custom_call.1} parent=1 // pred_check_branch
      %41 = sbr.rel (0) target = $region17
    $region16: #{tpu_custom_call.1} parent=1 // pred_region
      %43 = dma.done [#allocation6], 256
    $region17: #{tpu_custom_call.1} parent=1 // pred_fallthru
      _
    %p44 = scmp.eq.s32.totalorder 0, 0
    // Predicated region
    $region18: #{tpu_custom_call.1} parent=1 // pred_check
      %p45 = pneg %p44
    $region19: #{tpu_custom_call.1} parent=1 // pred_check_branch
      %47 = sbr.rel (%p45) target = $region21
    $region20: #{tpu_custom_call.1} parent=1 // pred_region
      %48 = vst [vmem:[#allocation7] sm:$0xff] 0.0
    $region21: #{tpu_custom_call.1} parent=1 // pred_fallthru
      _
    %v49 = vld [vmem:[#allocation2] sm:$0xff]
    %v50 = vld [vmem:[#allocation2 + $0x8] sm:$0xff]
    %v51 = vld [vmem:[#allocation5] sm:$0xff]
    %v52 = vld [vmem:[#allocation5 + $0x8] sm:$0xff]
    %v53 = vsub.f32 %v49, %v51
    %v54 = vsub.f32 %v50, %v52
    %v55 = vmul.f32 %v53, %v53
    %v56 = vmul.f32 %v54, %v54
    %v57 = vld [vmem:[#allocation7] sm:$0xff]
    %v58 = vadd.f32 %v55, %v56
    %v59 = vadd.f32 %v57, %v58
    %60 = vst [vmem:[#allocation7] sm:$0xff] %v59
    // Predicated region
    $region22: #{tpu_custom_call.1} parent=1 // pred_check
      _
    $region23: #{tpu_custom_call.1} parent=1 // pred_check_branch
      %62 = sbr.rel (0) target = $region25
    $region24: #{tpu_custom_call.1} parent=1 // pred_region
      %64 = vsyncadd [#allocation4], 0
      %s66 = sshll.u32 [#allocation7], 4
      %s67 = int_to_ptr.vmem [resolvable:$true] %s66
      %s68 = sshll.u32 %s2, 4
      %s69 = int_to_ptr.hbm [resolvable:$true] %s68
      %71 = dma.vmem_to_hbm [thread:$0]  %s67, 128, %s69, [#allocation4]
    $region25: #{tpu_custom_call.1} parent=1 // pred_fallthru
      _
    // Predicated region
    $region26: #{tpu_custom_call.1} parent=1 // pred_check
      _
    $region27: #{tpu_custom_call.1} parent=1 // pred_check_branch
      %73 = sbr.rel (0) target = $region29
    $region28: #{tpu_custom_call.1} parent=1 // pred_region
      %75 = dma.done [#allocation4], 128
    $region29: #{tpu_custom_call.1} parent=1 // pred_fallthru
      _
    %76 = vsyncpa [#allocation3], 1
    %77 = vsyncpa [#allocation6], 1
    %78 = vsyncpa [#allocation4], 1

</llo_original>
